<compile_context>
chip_gen: v7x
topology: tpu7x:2x2x1
jax: 0.10.0
libtpu: 0.0.40
codegen_flags: <defaults>
</compile_context>

<pallas_src>
import jax
import jax.numpy as jnp
from jax.experimental import pallas as pl
from jax.experimental.pallas import tpu as pltpu

FALLBACK_LANE = 512                  # lane width when no natural lane-dense dim exists
MAX_BLOCK_BYTES = 2 * 1024 * 1024    # <= 2 MiB per buffer (4 buffers w/ double-buffering)
MIN_GRID_STEPS = 8                   # >= 8 steps -> v7x megacore + pipeline overlap


def _cdiv(a, b):
    return -(-a // b)


def _round_up(a, b):
    return _cdiv(a, b) * b


def _h_sigmoid_kernel(x_ref, o_ref):
    x = x_ref[...]
    # ReLU6(x + 3) / 6  ==  clamp(x + 3, 0, 6) * (1/6)
    y = jnp.minimum(jnp.maximum(x + 3.0, 0.0), 6.0) * (1.0 / 6.0)
    o_ref[...] = y.astype(o_ref.dtype)


def _pick_blocks(rows, lane, itemsize):
    """Choose (block_rows, block_lane) for a lane-dense (rows, lane) array."""
    sub_align = 16 if itemsize < 4 else 8          # bf16 packs 2 rows per sublane
    max_elems = MAX_BLOCK_BYTES // itemsize

    # Lane block: keep the full lane when a minimal slab fits the byte budget,
    # otherwise tile the lane dim in multiples of 128.
    if lane * sub_align <= max_elems or lane <= 128:
        block_lane = lane
    else:
        block_lane = max(128, ((max_elems // sub_align) // 128) * 128)
        block_lane = min(block_lane, lane)

    # Row block: fill the byte budget but keep >= MIN_GRID_STEPS steps of work.
    max_rows = max(sub_align, ((max_elems // block_lane) // sub_align) * sub_align)
    target_rows = _round_up(max(1, _cdiv(rows, MIN_GRID_STEPS)), sub_align)
    block_rows = min(max_rows, target_rows)
    if block_rows >= rows:
        block_rows = rows            # full-extent dim: (8,128) constraint waived
    return block_rows, block_lane


def _run_2d(x2, rows, lane):
    block_rows, block_lane = _pick_blocks(rows, lane, x2.dtype.itemsize)
    grid = (_cdiv(rows, block_rows), _cdiv(lane, block_lane))
    return pl.pallas_call(
        _h_sigmoid_kernel,
        out_shape=jax.ShapeDtypeStruct((rows, lane), x2.dtype),
        grid=grid,
        in_specs=[pl.BlockSpec((block_rows, block_lane), lambda i, j: (i, j))],
        out_specs=pl.BlockSpec((block_rows, block_lane), lambda i, j: (i, j)),
        input_output_aliases={0: 0},
        compiler_params=pltpu.CompilerParams(
            dimension_semantics=("parallel", "parallel"),
        ),
    )(x2)


def h_sigmoid(x):
    """Elementwise hard-sigmoid: relu6(x + 3) / 6 (matches the PyTorch module)."""
    if not jnp.issubdtype(x.dtype, jnp.floating):
        x = x.astype(jnp.float32)    # torch's `/ 6` promotes integer inputs to float

    shape = x.shape
    total = x.size
    if total == 0:
        return x

    # Pick a lane-dense 2D view with no (or minimal) data movement:
    #  1) last dim already a multiple of 128 -> collapse leading dims only;
    #  2) last-two-dims product a multiple of 128 (e.g. NCHW, H*W=256) ->
    #     collapse them into the lane dim;
    #  3) otherwise flatten and pad only up to a multiple of FALLBACK_LANE
    #     (Pallas masks the partial last block, so no block-multiple round-up).
    if shape[-1] % 128 == 0:
        lane = shape[-1]
        rows = total // lane
        return _run_2d(x.reshape(rows, lane), rows, lane).reshape(shape)

    if len(shape) >= 2 and (shape[-2] * shape[-1]) % 128 == 0:
        lane = shape[-2] * shape[-1]
        rows = total // lane
        return _run_2d(x.reshape(rows, lane), rows, lane).reshape(shape)

    lane = FALLBACK_LANE
    rows = _cdiv(total, lane)
    padded_total = rows * lane
    flat = x.reshape(-1)
    if padded_total != total:
        flat = jnp.pad(flat, (0, padded_total - total))
    out_flat = _run_2d(flat.reshape(rows, lane), rows, lane).reshape(-1)
    if padded_total != total:
        out_flat = out_flat[:total]
    return out_flat.reshape(shape)


def _reference(x):
    return jnp.clip(x + 3.0, 0.0, 6.0) / 6.0


if __name__ == "__main__":
    key = jax.random.PRNGKey(0)

    # Main case (matches the module's typical NCHW activation): H*W = 256 -> no pad/slice.
    x0 = jax.random.normal(key, (2, 4, 16, 16), dtype=jnp.float32) * 4.0
    y0 = h_sigmoid(x0)
    jax.block_until_ready(y0)
    assert y0.shape == x0.shape
    assert jnp.allclose(y0, _reference(x0), atol=1e-6), "mismatch (case 2: lane = H*W)"

    # Case 1: last dim already a multiple of 128 (pure dim-collapse path).
    k1, k2 = jax.random.split(key)
    x1 = jax.random.normal(k1, (2, 8, 128), dtype=jnp.float32) * 4.0
    y1 = h_sigmoid(x1)
    jax.block_until_ready(y1)
    assert jnp.allclose(y1, _reference(x1), atol=1e-6), "mismatch (case 1: lane = last dim)"

    # Fallback case: non-128-friendly dims -> minimal pad + partial last block masking.
    x2 = jax.random.normal(k2, (4, 3, 40, 40), dtype=jnp.float32) * 4.0
    y2 = h_sigmoid(x2)
    jax.block_until_ready(y2)
    assert jnp.allclose(y2, _reference(x2), atol=1e-6), "mismatch (fallback path)"

    print("KERNEL_OK")
</pallas_src>

<mosaic_0001>
module attributes {stable_mosaic.version = 11 : i64} {
  func.func @_h_sigmoid_kernel(%arg0: i32, %arg1: i32, %arg2: memref<8x256xf32, #tpu.memory_space<vmem>>, %arg3: memref<8x256xf32, #tpu.memory_space<vmem>>) attributes {dimension_semantics = [#tpu.dimension_semantics<parallel>, #tpu.dimension_semantics<parallel>], iteration_bounds = array<i64: 1, 1>, scalar_prefetch = 0 : i64, scratch_operands = 0 : i64, tpu.core_type = #tpu.core_type<tc>, window_params = [{transform_indices = @transform_0, window_bounds = array<i64: 8, 256>}, {transform_indices = @transform_1, window_bounds = array<i64: 8, 256>}]} {
    %c0 = arith.constant 0 : index
    %c0_0 = arith.constant 0 : index
    %0 = vector.load %arg2[%c0, %c0_0] : memref<8x256xf32, #tpu.memory_space<vmem>>, vector<8x256xf32>
    %cst = arith.constant 3.000000e+00 : f32
    %1 = vector.broadcast %cst : f32 to vector<8x256xf32>
    %2 = arith.addf %0, %1 : vector<8x256xf32>
    %cst_1 = arith.constant 0.000000e+00 : f32
    %3 = vector.broadcast %cst_1 : f32 to vector<8x256xf32>
    %4 = arith.maximumf %2, %3 : vector<8x256xf32>
    %cst_2 = arith.constant 6.000000e+00 : f32
    %5 = vector.broadcast %cst_2 : f32 to vector<8x256xf32>
    %6 = arith.minimumf %4, %5 : vector<8x256xf32>
    %cst_3 = arith.constant 0.166666672 : f32
    %7 = vector.broadcast %cst_3 : f32 to vector<8x256xf32>
    %8 = arith.mulf %6, %7 : vector<8x256xf32>
    %c0_4 = arith.constant 0 : index
    %c0_5 = arith.constant 0 : index
    %9 = vector.load %arg3[%c0_4, %c0_5] : memref<8x256xf32, #tpu.memory_space<vmem>>, vector<8x256xf32>
    tpu.vector_store %arg3[%c0_4, %c0_5], %8 {strides = array<i32>} : memref<8x256xf32, #tpu.memory_space<vmem>>, vector<8x256xf32>,
    return
  }
  func.func @transform_0(%arg0: i32, %arg1: i32) -> (i32, i32) {
    %c0_i32 = arith.constant 0 : i32
    return %arg0, %arg1 : i32, i32
  }
  func.func @transform_1(%arg0: i32, %arg1: i32) -> (i32, i32) {
    %c0_i32 = arith.constant 0 : i32
    return %arg0, %arg1 : i32, i32
  }
}

</mosaic_0001>

<llo_original>
// kernel: tpu_custom_call.1
$region0: #{tpu_custom_call.1}
  #allocation0 [shape = 'u32[]', space=smem, size = 0x4, offset = 0x4, fixed_abs, tag = 'smem constant byte address 0x4 - core index']
  #allocation1 [shape = 'u32[144,128]{1,0:T(1,128)}', space=vmem, size = 0x12000, scoped, tag = 'internal scratch']
  %s0 = inlined_call_operand.hbm [shape: f32[8,256], index: 0, kind: input, shape index: {}, may-alias: {0,1}]
  %s1 = inlined_call_operand.hbm [shape: f32[8,256], index: 1, kind: output, shape index: {}, may-alias: {0,1}]
  %s2 = sld [smem:[#allocation0]]
  $region18: #{tpu_custom_call.1} parent=0
    _
  %s4 = ssub.s32 1, %s2
  %s5 = scalar_select 0, %s4, %s2
  $region1: #{tpu_custom_call.1} parent=0
    #allocation2 [shape = 'u8[8192]{0}', space=vmem, size = 0x2000, scoped, tag = 'input window, operand 0, single buffered']
    #allocation3 [shape = 's32[1]{0}', space=sflag, size = 0x4, scoped, tag = 'scoped memory for tpu_custom_call.1']
    #allocation4 [shape = 's32[1]{0}', space=sflag, size = 0x4, scoped, tag = 'scoped memory for tpu_custom_call.1']
    #allocation5 [shape = 'u8[8192]{0}', space=vmem, size = 0x2000, scoped, tag = 'output window, operand 0, single buffered']
    %6 = vsyncpa [#allocation3], 0
    %7 = vsyncpa [#allocation4], 0
    // Predicated region
    $region2: #{tpu_custom_call.1} parent=1 // pred_check
      _
    $region3: #{tpu_custom_call.1} parent=1 // pred_check_branch
      %9 = sbr.rel (0) target = $region5
    $region4: #{tpu_custom_call.1} parent=1 // pred_region
      %s11 = ssub.s32 256, 256
      %12 = vsyncadd [#allocation3], %s11
      %s14 = sshll.u32 [#allocation2], 4
      %s15 = int_to_ptr.vmem [resolvable:$true] %s14
      %17 = dma.hbm_to_vmem [thread:$0]  %s0, 256, %s15, [#allocation3]
    $region5: #{tpu_custom_call.1} parent=1 // pred_fallthru
      _
    // Predicated region
    $region6: #{tpu_custom_call.1} parent=1 // pred_check
      _
    $region7: #{tpu_custom_call.1} parent=1 // pred_check_branch
      %19 = sbr.rel (0) target = $region9
    $region8: #{tpu_custom_call.1} parent=1 // pred_region
      %20 = dma.done [#allocation3], 256
    $region9: #{tpu_custom_call.1} parent=1 // pred_fallthru
      _
    %v21 = vld [vmem:[#allocation2] sm:$0xff]
    %v22 = vld [vmem:[#allocation2 + $0x8] sm:$0xff]
    %v23 = vadd.f32 %v21, 3.0
    %v24 = vadd.f32 %v22, 3.0
    %v25 = vmax.f32 %v23, 0.0
    %v26 = vmax.f32 %v24, 0.0
    %v27 = vmin.f32 %v25, 6.0
    %v28 = vmin.f32 %v26, 6.0
    %v29 = vmul.f32 %v27, 0.16666667
    %v30 = vmul.f32 %v28, 0.16666667
    %31 = vst [vmem:[#allocation5] sm:$0xff] %v29
    %32 = vst [vmem:[#allocation5 + $0x8] sm:$0xff] %v30
    // Predicated region
    $region10: #{tpu_custom_call.1} parent=1 // pred_check
      _
    $region11: #{tpu_custom_call.1} parent=1 // pred_check_branch
      %34 = sbr.rel (0) target = $region13
    $region12: #{tpu_custom_call.1} parent=1 // pred_region
      %s36 = ssub.s32 256, 256
      %37 = vsyncadd [#allocation4], %s36
      %s39 = sshll.u32 [#allocation5], 4
      %s40 = int_to_ptr.vmem [resolvable:$true] %s39
      %42 = dma.vmem_to_hbm [thread:$0]  %s40, 256, %s1, [#allocation4]
    $region13: #{tpu_custom_call.1} parent=1 // pred_fallthru
      _
    // Predicated region
    $region14: #{tpu_custom_call.1} parent=1 // pred_check
      _
    $region15: #{tpu_custom_call.1} parent=1 // pred_check_branch
      %44 = sbr.rel (0) target = $region17
    $region16: #{tpu_custom_call.1} parent=1 // pred_region
      %45 = dma.done [#allocation4], 256
    $region17: #{tpu_custom_call.1} parent=1 // pred_fallthru
      _
    %46 = vsyncpa [#allocation3], 1
    %47 = vsyncpa [#allocation4], 1

</llo_original>
